<compile_context>
chip_gen: v5e
topology: v5e:2x2
jax: 0.10.0
libtpu: 0.0.40
codegen_flags: <defaults>
</compile_context>

<pallas_src>
import functools

import jax
import jax.numpy as jnp
from jax.experimental import pallas as pl
from jax.experimental.pallas import tpu as pltpu

H1 = 128   # fc1 hidden (64) zero-padded to 128
H2 = 128   # fc2 hidden
H3 = 256   # fc3 hidden


def _round_up(n, m):
    return (n + m - 1) // m * m


def decoder_kernel(x_ref, w1_ref, w2_ref, w3_ref, w4_ref, b_ref, o_ref, *, out_dim):
    # fc1 + ReLU  (hidden zero-padded 64->128; pad lanes stay exactly 0 through ReLU)
    h = jnp.dot(x_ref[...].astype(jnp.bfloat16), w1_ref[...],
                preferred_element_type=jnp.float32)
    h = jnp.maximum(h + b_ref[0:1, 0:H1], 0.0)
    # fc2 + ReLU
    h = jnp.dot(h.astype(jnp.bfloat16), w2_ref[...],
                preferred_element_type=jnp.float32)
    h = jnp.maximum(h + b_ref[1:2, 0:H2], 0.0)
    # fc3 + ReLU
    h = jnp.dot(h.astype(jnp.bfloat16), w3_ref[...],
                preferred_element_type=jnp.float32)
    h = jnp.maximum(h + b_ref[2:3, 0:H3], 0.0)
    # fc4 (no activation)
    logits = jnp.dot(h.astype(jnp.bfloat16), w4_ref[...],
                     preferred_element_type=jnp.float32)
    logits = logits + b_ref[3:4, 0:out_dim]
    # numerically-stable softmax in f32; reciprocal goes to the EUP slot
    m = jnp.max(logits, axis=-1, keepdims=True)
    e = jnp.exp(logits - m)
    denom = jnp.sum(e, axis=-1, keepdims=True)
    o_ref[...] = (e * pl.reciprocal(denom, approx=False)).astype(o_ref.dtype)


def pack_params(params, out_dim):
    """Pad the 64-wide hidden layer to 128, cast weights to bf16, pack biases [4, BPAD]."""
    (w1, b1), (w2, b2), (w3, b3), (w4, b4) = (
        params["fc1"], params["fc2"], params["fc3"], params["fc4"])
    k = w1.shape[0]
    w1p = jnp.zeros((k, H1), jnp.bfloat16).at[:, : w1.shape[1]].set(
        w1.astype(jnp.bfloat16))
    w2p = jnp.zeros((H1, H2), jnp.bfloat16).at[: w2.shape[0], :].set(
        w2.astype(jnp.bfloat16))
    w3p = w3.astype(jnp.bfloat16)
    w4p = w4.astype(jnp.bfloat16)

    bpad = max(H3, out_dim)
    b = jnp.zeros((4, bpad), jnp.float32)
    b = b.at[0, : b1.shape[-1]].set(b1.reshape(-1))
    b = b.at[1, : b2.shape[-1]].set(b2.reshape(-1))
    b = b.at[2, : b3.shape[-1]].set(b3.reshape(-1))
    b = b.at[3, : b4.shape[-1]].set(b4.reshape(-1))
    return w1p, w2p, w3p, w4p, b


def decoder_forward(x, params, *, tb=None):
    """x: [B, encoded_dim] f32; params: dict of (W[in,out], b[1,out]) per layer."""
    B, K = x.shape
    out_dim = params["fc4"][0].shape[1]
    w1p, w2p, w3p, w4p, bpack = pack_params(params, out_dim)
    bpad = bpack.shape[1]

    # Batch tile: multiple of 8 (sublane); ideally a multiple of 256 for full MXU
    # row occupancy at large B, but never larger than the (padded) batch.
    if tb is None:
        tb = min(512, _round_up(B, 8))
    tb = _round_up(tb, 8)
    Bp = _round_up(B, tb)
    if Bp != B:
        x = jnp.pad(x, ((0, Bp - B), (0, 0)))

    grid = (Bp // tb,)

    flops = 2 * Bp * (K * H1 + H1 * H2 + H2 * H3 + H3 * out_dim)
    bytes_accessed = (
        Bp * K * 4 + Bp * out_dim * 4
        + 2 * (w1p.size + w2p.size + w3p.size + w4p.size)
        + 4 * bpack.size)
    cost = pl.CostEstimate(flops=flops,
                           transcendentals=Bp * out_dim + Bp,
                           bytes_accessed=bytes_accessed)

    out = pl.pallas_call(
        functools.partial(decoder_kernel, out_dim=out_dim),
        out_shape=jax.ShapeDtypeStruct((Bp, out_dim), jnp.float32),
        grid=grid,
        in_specs=[
            pl.BlockSpec((tb, K), lambda i: (i, 0)),          # x: streams per tile
            pl.BlockSpec((K, H1), lambda i: (0, 0)),          # weights: pinned in VMEM
            pl.BlockSpec((H1, H2), lambda i: (0, 0)),
            pl.BlockSpec((H2, H3), lambda i: (0, 0)),
            pl.BlockSpec((H3, out_dim), lambda i: (0, 0)),
            pl.BlockSpec((4, bpad), lambda i: (0, 0)),        # packed biases
        ],
        out_specs=pl.BlockSpec((tb, out_dim), lambda i: (i, 0)),
        compiler_params=pltpu.CompilerParams(
            dimension_semantics=("parallel",),
            vmem_limit_bytes=32 * 1024 * 1024,
        ),
        cost_estimate=cost,
    )(x, w1p, w2p, w3p, w4p, bpack)
    return out[:B]


def reference_forward(x, params, out_dim):
    """Pure-JAX reference mirroring the kernel's bf16 weight/activation casts."""
    (w1, b1), (w2, b2), (w3, b3), (w4, b4) = (
        params["fc1"], params["fc2"], params["fc3"], params["fc4"])
    def lin(h, w, b):
        y = jnp.dot(h.astype(jnp.bfloat16), w.astype(jnp.bfloat16),
                    preferred_element_type=jnp.float32)
        return y + b
    h = jnp.maximum(lin(x, w1, b1), 0.0)
    h = jnp.maximum(lin(h, w2, b2), 0.0)
    h = jnp.maximum(lin(h, w3, b3), 0.0)
    logits = lin(h, w4, b4)
    return jax.nn.softmax(logits, axis=-1)


def init_linear(key, in_dim, out_dim):
    """Deterministic init matching nn.Linear's uniform(-1/sqrt(in), 1/sqrt(in))."""
    kw, kb = jax.random.split(key)
    bound = 1.0 / (in_dim ** 0.5)
    w = jax.random.uniform(kw, (in_dim, out_dim), jnp.float32, -bound, bound)
    b = jax.random.uniform(kb, (1, out_dim), jnp.float32, -bound, bound)
    return w, b


if __name__ == "__main__":
    encoded_dim = 10   # args.encoded_dim default
    output_dim = 256   # decoder output dimension (synthetic choice)
    batch = 8

    key = jax.random.PRNGKey(0)
    kx, k1, k2, k3, k4, kx2 = jax.random.split(key, 6)

    params = {
        "fc1": init_linear(k1, encoded_dim, 64),
        "fc2": init_linear(k2, 64, 128),
        "fc3": init_linear(k3, 128, 256),
        "fc4": init_linear(k4, 256, output_dim),
    }

    x = jax.random.normal(kx, (batch, encoded_dim), jnp.float32)

    out = decoder_forward(x, params)
    out = jax.block_until_ready(out)

    # sanity: shape, softmax rows sum to 1, matches bf16-mirrored reference
    assert out.shape == (batch, output_dim)
    assert jnp.allclose(jnp.sum(out, axis=-1), 1.0, atol=1e-5)
    ref = reference_forward(x, params, output_dim)
    assert jnp.allclose(out, ref, atol=1e-2)

    # exercise the multi-tile grid + batch-padding path with a small tile
    x2 = jax.random.normal(kx2, (40, encoded_dim), jnp.float32)
    out2 = jax.block_until_ready(decoder_forward(x2, params, tb=16))
    assert out2.shape == (40, output_dim)
    assert jnp.allclose(jnp.sum(out2, axis=-1), 1.0, atol=1e-5)
    assert jnp.allclose(out2, reference_forward(x2, params, output_dim), atol=1e-2)

    print("KERNEL_OK")
</pallas_src>

<mosaic_0001>
module attributes {stable_mosaic.version = 11 : i64} {
  func.func @decoder_kernel(%arg0: i32, %arg1: memref<8x10xf32, #tpu.memory_space<vmem>>, %arg2: memref<10x128xbf16, #tpu.memory_space<vmem>>, %arg3: memref<128x128xbf16, #tpu.memory_space<vmem>>, %arg4: memref<128x256xbf16, #tpu.memory_space<vmem>>, %arg5: memref<256x256xbf16, #tpu.memory_space<vmem>>, %arg6: memref<4x256xf32, #tpu.memory_space<vmem>>, %arg7: memref<8x256xf32, #tpu.memory_space<vmem>>) attributes {dimension_semantics = [#tpu.dimension_semantics<parallel>], iteration_bounds = array<i64: 1>, scalar_prefetch = 0 : i64, scratch_operands = 0 : i64, tpu.core_type = #tpu.core_type<tc>, window_params = [{transform_indices = @transform_0, window_bounds = array<i64: 8, 10>}, {pipeline_mode = #tpu.pipeline_mode<synchronous>, transform_indices = @transform_1, window_bounds = array<i64: 10, 128>}, {pipeline_mode = #tpu.pipeline_mode<synchronous>, transform_indices = @transform_2, window_bounds = array<i64: 128, 128>}, {pipeline_mode = #tpu.pipeline_mode<synchronous>, transform_indices = @transform_3, window_bounds = array<i64: 128, 256>}, {pipeline_mode = #tpu.pipeline_mode<synchronous>, transform_indices = @transform_4, window_bounds = array<i64: 256, 256>}, {pipeline_mode = #tpu.pipeline_mode<synchronous>, transform_indices = @transform_5, window_bounds = array<i64: 4, 256>}, {transform_indices = @transform_6, window_bounds = array<i64: 8, 256>}]} {
    %c0 = arith.constant 0 : index
    %c0_0 = arith.constant 0 : index
    %0 = vector.load %arg1[%c0, %c0_0] : memref<8x10xf32, #tpu.memory_space<vmem>>, vector<8x10xf32>
    %1 = arith.truncf %0 : vector<8x10xf32> to vector<8x10xbf16>
    %c0_1 = arith.constant 0 : index
    %c0_2 = arith.constant 0 : index
    %2 = vector.load %arg2[%c0_1, %c0_2] : memref<10x128xbf16, #tpu.memory_space<vmem>>, vector<10x128xbf16>
    %cst = arith.constant dense<0.000000e+00> : vector<8x128xf32>
    %3 = tpu.matmul %1, %2, %cst {dimension_numbers = #tpu.dot_dimension_numbers<[1], [0], [0], [1], [0, 0, 1, 1], [], []>} : vector<8x10xbf16>, vector<10x128xbf16>, vector<8x128xf32> -> vector<8x128xf32>
    %c0_3 = arith.constant 0 : index
    %c0_4 = arith.constant 0 : index
    %4 = vector.load %arg6[%c0_3, %c0_4] : memref<4x256xf32, #tpu.memory_space<vmem>>, vector<1x128xf32>
    %5 = vector.broadcast %4 : vector<1x128xf32> to vector<8x128xf32>
    %6 = arith.addf %3, %5 : vector<8x128xf32>
    %cst_5 = arith.constant 0.000000e+00 : f32
    %7 = vector.broadcast %cst_5 : f32 to vector<8x128xf32>
    %8 = arith.maximumf %6, %7 : vector<8x128xf32>
    %9 = arith.truncf %8 : vector<8x128xf32> to vector<8x128xbf16>
    %c0_6 = arith.constant 0 : index
    %c0_7 = arith.constant 0 : index
    %10 = vector.load %arg3[%c0_6, %c0_7] : memref<128x128xbf16, #tpu.memory_space<vmem>>, vector<128x128xbf16>
    %cst_8 = arith.constant dense<0.000000e+00> : vector<8x128xf32>
    %11 = tpu.matmul %9, %10, %cst_8 {dimension_numbers = #tpu.dot_dimension_numbers<[1], [0], [0], [1], [0, 0, 1, 1], [], []>} : vector<8x128xbf16>, vector<128x128xbf16>, vector<8x128xf32> -> vector<8x128xf32>
    %c1 = arith.constant 1 : index
    %c0_9 = arith.constant 0 : index
    %12 = vector.load %arg6[%c1, %c0_9] : memref<4x256xf32, #tpu.memory_space<vmem>>, vector<1x128xf32>
    %13 = vector.broadcast %12 : vector<1x128xf32> to vector<8x128xf32>
    %14 = arith.addf %11, %13 : vector<8x128xf32>
    %cst_10 = arith.constant 0.000000e+00 : f32
    %15 = vector.broadcast %cst_10 : f32 to vector<8x128xf32>
    %16 = arith.maximumf %14, %15 : vector<8x128xf32>
    %17 = arith.truncf %16 : vector<8x128xf32> to vector<8x128xbf16>
    %c0_11 = arith.constant 0 : index
    %c0_12 = arith.constant 0 : index
    %18 = vector.load %arg4[%c0_11, %c0_12] : memref<128x256xbf16, #tpu.memory_space<vmem>>, vector<128x256xbf16>
    %cst_13 = arith.constant dense<0.000000e+00> : vector<8x256xf32>
    %19 = tpu.matmul %17, %18, %cst_13 {dimension_numbers = #tpu.dot_dimension_numbers<[1], [0], [0], [1], [0, 0, 1, 1], [], []>} : vector<8x128xbf16>, vector<128x256xbf16>, vector<8x256xf32> -> vector<8x256xf32>
    %c2 = arith.constant 2 : index
    %c0_14 = arith.constant 0 : index
    %20 = vector.load %arg6[%c2, %c0_14] : memref<4x256xf32, #tpu.memory_space<vmem>>, vector<1x256xf32>
    %21 = vector.broadcast %20 : vector<1x256xf32> to vector<8x256xf32>
    %22 = arith.addf %19, %21 : vector<8x256xf32>
    %cst_15 = arith.constant 0.000000e+00 : f32
    %23 = vector.broadcast %cst_15 : f32 to vector<8x256xf32>
    %24 = arith.maximumf %22, %23 : vector<8x256xf32>
    %25 = arith.truncf %24 : vector<8x256xf32> to vector<8x256xbf16>
    %c0_16 = arith.constant 0 : index
    %c0_17 = arith.constant 0 : index
    %26 = vector.load %arg5[%c0_16, %c0_17] : memref<256x256xbf16, #tpu.memory_space<vmem>>, vector<256x256xbf16>
    %cst_18 = arith.constant dense<0.000000e+00> : vector<8x256xf32>
    %27 = tpu.matmul %25, %26, %cst_18 {dimension_numbers = #tpu.dot_dimension_numbers<[1], [0], [0], [1], [0, 0, 1, 1], [], []>} : vector<8x256xbf16>, vector<256x256xbf16>, vector<8x256xf32> -> vector<8x256xf32>
    %c3 = arith.constant 3 : index
    %c0_19 = arith.constant 0 : index
    %28 = vector.load %arg6[%c3, %c0_19] : memref<4x256xf32, #tpu.memory_space<vmem>>, vector<1x256xf32>
    %29 = vector.broadcast %28 : vector<1x256xf32> to vector<8x256xf32>
    %30 = arith.addf %27, %29 : vector<8x256xf32>
    %cst_20 = arith.constant dense<0xFF800000> : vector<8xf32>
    %31 = vector.multi_reduction <maximumf>, %30, %cst_20 [1] : vector<8x256xf32> to vector<8xf32>
    %32 = vector.shape_cast %31 : vector<8xf32> to vector<8x1xf32>
    %33 = vector.broadcast %32 : vector<8x1xf32> to vector<8x256xf32>
    %34 = arith.subf %30, %33 : vector<8x256xf32>
    %35 = math.exp %34 : vector<8x256xf32>
    %cst_21 = arith.constant dense<0.000000e+00> : vector<8xf32>
    %36 = vector.multi_reduction <add>, %35, %cst_21 [1] : vector<8x256xf32> to vector<8xf32>
    %37 = vector.shape_cast %36 : vector<8xf32> to vector<8x1xf32>
    %38 = tpu.reciprocal %37 : vector<8x1xf32> -> vector<8x1xf32>
    %39 = vector.broadcast %38 : vector<8x1xf32> to vector<8x256xf32>
    %40 = arith.mulf %35, %39 : vector<8x256xf32>
    %c0_22 = arith.constant 0 : index
    %c0_23 = arith.constant 0 : index
    %41 = vector.load %arg7[%c0_22, %c0_23] : memref<8x256xf32, #tpu.memory_space<vmem>>, vector<8x256xf32>
    tpu.vector_store %arg7[%c0_22, %c0_23], %40 {strides = array<i32>} : memref<8x256xf32, #tpu.memory_space<vmem>>, vector<8x256xf32>,
    return
  }
  func.func @transform_0(%arg0: i32) -> (i32, i32) {
    %c0_i32 = arith.constant 0 : i32
    %c0_i32_0 = arith.constant 0 : i32
    return %arg0, %c0_i32 : i32, i32
  }
  func.func @transform_1(%arg0: i32) -> (i32, i32) {
    %c0_i32 = arith.constant 0 : i32
    %c0_i32_0 = arith.constant 0 : i32
    %c0_i32_1 = arith.constant 0 : i32
    return %c0_i32, %c0_i32_0 : i32, i32
  }
  func.func @transform_2(%arg0: i32) -> (i32, i32) {
    %c0_i32 = arith.constant 0 : i32
    %c0_i32_0 = arith.constant 0 : i32
    %c0_i32_1 = arith.constant 0 : i32
    return %c0_i32, %c0_i32_0 : i32, i32
  }
  func.func @transform_3(%arg0: i32) -> (i32, i32) {
    %c0_i32 = arith.constant 0 : i32
    %c0_i32_0 = arith.constant 0 : i32
    %c0_i32_1 = arith.constant 0 : i32
    return %c0_i32, %c0_i32_0 : i32, i32
  }
  func.func @transform_4(%arg0: i32) -> (i32, i32) {
    %c0_i32 = arith.constant 0 : i32
    %c0_i32_0 = arith.constant 0 : i32
    %c0_i32_1 = arith.constant 0 : i32
    return %c0_i32, %c0_i32_0 : i32, i32
  }
  func.func @transform_5(%arg0: i32) -> (i32, i32) {
    %c0_i32 = arith.constant 0 : i32
    %c0_i32_0 = arith.constant 0 : i32
    %c0_i32_1 = arith.constant 0 : i32
    return %c0_i32, %c0_i32_0 : i32, i32
  }
  func.func @transform_6(%arg0: i32) -> (i32, i32) {
    %c0_i32 = arith.constant 0 : i32
    %c0_i32_0 = arith.constant 0 : i32
    return %arg0, %c0_i32 : i32, i32
  }
}

</mosaic_0001>

<llo_original>
// kernel: tpu_custom_call.1
$region0: #{tpu_custom_call.1}
  #allocation0 [shape = 'u32[]', space=smem, size = 0x4, offset = 0x4, fixed_abs, tag = 'smem constant byte address 0x4 - core index']
  #allocation1 [shape = 'u32[72,128]{1,0:T(1,128)}', space=vmem, size = 0x9000, scoped, tag = 'internal scratch']
  %s0 = inlined_call_operand.hbm [shape: f32[8,10], index: 0, kind: input, shape index: {}]
  %s1 = inlined_call_operand.hbm [shape: bf16[10,128], index: 1, kind: input, shape index: {}]
  %s2 = inlined_call_operand.hbm [shape: bf16[128,128], index: 2, kind: input, shape index: {}]
  %s3 = inlined_call_operand.hbm [shape: bf16[128,256], index: 3, kind: input, shape index: {}]
  %s4 = inlined_call_operand.hbm [shape: bf16[256,256], index: 4, kind: input, shape index: {}]
  %s5 = inlined_call_operand.hbm [shape: f32[4,256], index: 5, kind: input, shape index: {}]
  %s6 = inlined_call_operand.hbm [shape: f32[8,256], index: 6, kind: output, shape index: {}]
  %s7 = sld [smem:[#allocation0]]
  $region58: #{tpu_custom_call.1} parent=0
    _
  %s9 = ssub.s32 1, %s7
  %s10 = scalar_select 0, %s9, %s7
  $region1: #{tpu_custom_call.1} parent=0
    #allocation2 [shape = 'u8[4096]{0}', space=vmem, size = 0x1000, scoped, tag = 'input window, operand 0, single buffered']
    #allocation3 [shape = 's32[1]{0}', space=sflag, size = 0x4, scoped, tag = 'scoped memory for tpu_custom_call.1']
    #allocation4 [shape = 's32[1]{0}', space=sflag, size = 0x4, scoped, tag = 'scoped memory for tpu_custom_call.1']
    #allocation5 [shape = 'u8[4096]{0}', space=vmem, size = 0x1000, scoped, tag = 'input window, operand 1, single buffered']
    #allocation6 [shape = 's32[1]{0}', space=sflag, size = 0x4, scoped, tag = 'scoped memory for tpu_custom_call.1']
    #allocation7 [shape = 'u8[32768]{0}', space=vmem, size = 0x8000, scoped, tag = 'input window, operand 2, single buffered']
    #allocation8 [shape = 'u8[65536]{0}', space=vmem, size = 0x10000, scoped, tag = 'input window, operand 3, single buffered']
    #allocation9 [shape = 's32[1]{0}', space=sflag, size = 0x4, scoped, tag = 'scoped memory for tpu_custom_call.1']
    #allocation10 [shape = 'u8[131072]{0}', space=vmem, size = 0x20000, scoped, tag = 'input window, operand 4, single buffered']
    #allocation11 [shape = 'u8[4096]{0}', space=vmem, size = 0x1000, scoped, tag = 'input window, operand 5, single buffered']
    #allocation12 [shape = 's32[1]{0}', space=sflag, size = 0x4, scoped, tag = 'scoped memory for tpu_custom_call.1']
    #allocation13 [shape = 'u8[8192]{0}', space=vmem, size = 0x2000, scoped, tag = 'output window, operand 0, single buffered']
    %11 = vsyncpa [#allocation3], 0
    %12 = vsyncpa [#allocation6], 0
    %13 = vsyncpa [#allocation9], 0
    %14 = vsyncpa [#allocation12], 0
    %15 = vsyncpa [#allocation4], 0
    // Predicated region
    $region2: #{tpu_custom_call.1} parent=1 // pred_check
      _
    $region3: #{tpu_custom_call.1} parent=1 // pred_check_branch
      %17 = sbr.rel (0) target = $region5
    $region4: #{tpu_custom_call.1} parent=1 // pred_region
      %19 = vsyncadd [#allocation3], 0
      %s21 = sshll.u32 %s0, 4
      %s22 = int_to_ptr.hbm [resolvable:$true] %s21
      %s23 = sshll.u32 [#allocation2], 4
      %s24 = int_to_ptr.vmem [resolvable:$true] %s23
      %26 = dma.hbm_to_vmem [thread:$0]  %s22, 128, %s24, [#allocation3]
    $region5: #{tpu_custom_call.1} parent=1 // pred_fallthru
      _
    // Predicated region
    $region6: #{tpu_custom_call.1} parent=1 // pred_check
      _
    $region7: #{tpu_custom_call.1} parent=1 // pred_check_branch
      %28 = sbr.rel (0) target = $region9
    $region8: #{tpu_custom_call.1} parent=1 // pred_region
      %30 = vsyncadd [#allocation6], 0
      %s31 = sshll.u32 %s1, 4
      %s32 = int_to_ptr.hbm [resolvable:$true] %s31
      %s33 = sshll.u32 [#allocation5], 4
      %s34 = int_to_ptr.vmem [resolvable:$true] %s33
      %39 = dma.hbm_to_vmem [thread:$0]  %s32, 128, %s34, [#allocation6], 64, 64, 4
    $region9: #{tpu_custom_call.1} parent=1 // pred_fallthru
      _
    // Predicated region
    $region10: #{tpu_custom_call.1} parent=1 // pred_check
      _
    $region11: #{tpu_custom_call.1} parent=1 // pred_check_branch
      %41 = sbr.rel (0) target = $region13
    $region12: #{tpu_custom_call.1} parent=1 // pred_region
      %43 = vsyncadd [#allocation6], 0
      %s44 = sshll.u32 %s2, 4
      %s45 = int_to_ptr.hbm [resolvable:$true] %s44
      %s46 = sshll.u32 [#allocation7], 4
      %s47 = int_to_ptr.vmem [resolvable:$true] %s46
      %52 = dma.hbm_to_vmem [thread:$0]  %s45, 1024, %s47, [#allocation6], 64, 64, 4
    $region13: #{tpu_custom_call.1} parent=1 // pred_fallthru
      _
    // Predicated region
    $region14: #{tpu_custom_call.1} parent=1 // pred_check
      _
    $region15: #{tpu_custom_call.1} parent=1 // pred_check_branch
      %54 = sbr.rel (0) target = $region17
    $region16: #{tpu_custom_call.1} parent=1 // pred_region
      %56 = vsyncadd [#allocation9], 0
      %s57 = sshll.u32 %s3, 4
      %s58 = int_to_ptr.hbm [resolvable:$true] %s57
      %s59 = sshll.u32 [#allocation8], 4
      %s60 = int_to_ptr.vmem [resolvable:$true] %s59
      %65 = dma.hbm_to_vmem [thread:$0]  %s58, 2048, %s60, [#allocation9], 128, 128, 8
    $region17: #{tpu_custom_call.1} parent=1 // pred_fallthru
      _
    // Predicated region
    $region18: #{tpu_custom_call.1} parent=1 // pred_check
      _
    $region19: #{tpu_custom_call.1} parent=1 // pred_check_branch
      %67 = sbr.rel (0) target = $region21
    $region20: #{tpu_custom_call.1} parent=1 // pred_region
      %69 = vsyncadd [#allocation9], 0
      %s70 = sshll.u32 %s4, 4
      %s71 = int_to_ptr.hbm [resolvable:$true] %s70
      %s72 = sshll.u32 [#allocation10], 4
      %s73 = int_to_ptr.vmem [resolvable:$true] %s72
      %78 = dma.hbm_to_vmem [thread:$0]  %s71, 4096, %s73, [#allocation9], 128, 128, 8
    $region21: #{tpu_custom_call.1} parent=1 // pred_fallthru
      _
    // Predicated region
    $region22: #{tpu_custom_call.1} parent=1 // pred_check
      _
    $region23: #{tpu_custom_call.1} parent=1 // pred_check_branch
      %80 = sbr.rel (0) target = $region25
    $region24: #{tpu_custom_call.1} parent=1 // pred_region
      %82 = vsyncadd [#allocation12], 0
      %s84 = sshll.u32 %s5, 4
      %s85 = int_to_ptr.hbm [resolvable:$true] %s84
      %s86 = sshll.u32 [#allocation11], 4
      %s87 = int_to_ptr.vmem [resolvable:$true] %s86
      %89 = dma.hbm_to_vmem [thread:$0]  %s85, 128, %s87, [#allocation12]
    $region25: #{tpu_custom_call.1} parent=1 // pred_fallthru
      _
    // Predicated region
    $region26: #{tpu_custom_call.1} parent=1 // pred_check
      _
    $region27: #{tpu_custom_call.1} parent=1 // pred_check_branch
      %91 = sbr.rel (0) target = $region29
    $region28: #{tpu_custom_call.1} parent=1 // pred_region
      %93 = dma.done [#allocation3], 128
    $region29: #{tpu_custom_call.1} parent=1 // pred_fallthru
      _
    // Predicated region
    $region30: #{tpu_custom_call.1} parent=1 // pred_check
      _
    $region31: #{tpu_custom_call.1} parent=1 // pred_check_branch
      %95 = sbr.rel (0) target = $region33
    $region32: #{tpu_custom_call.1} parent=1 // pred_region
      %97 = dma.done [#allocation6], 128
    $region33: #{tpu_custom_call.1} parent=1 // pred_fallthru
      _
    // Predicated region
    $region34: #{tpu_custom_call.1} parent=1 // pred_check
      _
    $region35: #{tpu_custom_call.1} parent=1 // pred_check_branch
      %99 = sbr.rel (0) target = $region37
    $region36: #{tpu_custom_call.1} parent=1 // pred_region
      %101 = dma.done [#allocation6], 1024
    $region37: #{tpu_custom_call.1} parent=1 // pred_fallthru
      _
    // Predicated region
    $region38: #{tpu_custom_call.1} parent=1 // pred_check
      _
    $region39: #{tpu_custom_call.1} parent=1 // pred_check_branch
      %103 = sbr.rel (0) target = $region41
    $region40: #{tpu_custom_call.1} parent=1 // pred_region
      %105 = dma.done [#allocation9], 2048
    $region41: #{tpu_custom_call.1} parent=1 // pred_fallthru
      _
    // Predicated region
    $region42: #{tpu_custom_call.1} parent=1 // pred_check
      _
    $region43: #{tpu_custom_call.1} parent=1 // pred_check_branch
      %107 = sbr.rel (0) target = $region45
    $region44: #{tpu_custom_call.1} parent=1 // pred_region
      %109 = dma.done [#allocation9], 4096
    $region45: #{tpu_custom_call.1} parent=1 // pred_fallthru
      _
    // Predicated region
    $region46: #{tpu_custom_call.1} parent=1 // pred_check
      _
    $region47: #{tpu_custom_call.1} parent=1 // pred_check_branch
      %111 = sbr.rel (0) target = $region49
    $region48: #{tpu_custom_call.1} parent=1 // pred_region
      %113 = dma.done [#allocation12], 128
    $region49: #{tpu_custom_call.1} parent=1 // pred_fallthru
      _
    %v115 = vld [vmem:[#allocation2] sm:$0xff]
    %v116 = vpack.c.bf16 %v115, %v115
    %v117 = vld [vmem:[#allocation5] sm:$0xf]
    %v118 = vld [vmem:[#allocation5 + $0x4] sm:$0x1]
    %v119 = vld [vmem:[#allocation11] sm:$0x1]
    %v120 = vperm.slane %v119, 0
    %v123 = vunpack.c.l.b16 %v117
    %v124 = vunpack.c.l.b16 %v118
    %v125 = vpack.c.b16 %v124, %v123
    %vm126 = vcmask 80896
    %v128 = vsel %vm126, %v116, 0
    %vm130 = vcmask 1044480
    %v132 = vsel %vm130, %v125, 0
    %134 = vmatpush.bf16.msra.mxu0 0
    %135 = vmatpush.bf16.msra.mxu0 0
    %136 = vmatpush.bf16.msra.mxu0 0
    %137 = vmatpush.bf16.msra.mxu0 0
    %138 = vmatpush.bf16.msra.mxu0 0
    %139 = vmatpush.bf16.msra.mxu0 0
    %140 = vmatpush.bf16.msra.mxu0 0
    %141 = vmatpush.bf16.msra.mxu0 %v132
    %142 = vmatmul.bf16.gmra.mxu0 %v128
    %v143 = vpop.f32.mrf.mxu0
    %v144 = vadd.f32 %v120, %v143
    %v145 = vpop.f32.mrf.mxu0
    %146 = vdwg.mxu0
    %v147 = vmax.f32 %v144, 0.0
    %v148 = vpack.c.bf16 %v147, %v147
    %v149 = vld [vmem:[#allocation7] sm:$0xf]
    %v150 = vld [vmem:[#allocation7 + $0x4] sm:$0xf]
    %v151 = vld [vmem:[#allocation7 + $0x8] sm:$0xf]
    %v152 = vld [vmem:[#allocation7 + $0xc] sm:$0xf]
    %v153 = vld [vmem:[#allocation7 + $0x10] sm:$0xf]
    %v154 = vld [vmem:[#allocation7 + $0x14] sm:$0xf]
    %v155 = vld [vmem:[#allocation7 + $0x18] sm:$0xf]
    %v156 = vld [vmem:[#allocation7 + $0x1c] sm:$0xf]
    %v157 = vld [vmem:[#allocation7 + $0x20] sm:$0xf]
    %v158 = vld [vmem:[#allocation7 + $0x24] sm:$0xf]
    %v159 = vld [vmem:[#allocation7 + $0x28] sm:$0xf]
    %v160 = vld [vmem:[#allocation7 + $0x2c] sm:$0xf]
    %v161 = vld [vmem:[#allocation7 + $0x30] sm:$0xf]
    %v162 = vld [vmem:[#allocation7 + $0x34] sm:$0xf]
    %v163 = vld [vmem:[#allocation7 + $0x38] sm:$0xf]
    %v164 = vld [vmem:[#allocation7 + $0x3c] sm:$0xf]
    %v165 = vld [vmem:[#allocation11 + $0x1] sm:$0x1]
    %v166 = vperm.slane %v165, 0
    %v183 = vunpack.c.l.b16 %v149
    %v184 = vunpack.c.l.b16 %v150
    %v185 = vunpack.c.l.b16 %v151
    %v186 = vunpack.c.l.b16 %v152
    %v187 = vunpack.c.l.b16 %v153
    %v188 = vunpack.c.l.b16 %v154
    %v189 = vunpack.c.l.b16 %v155
    %v190 = vunpack.c.l.b16 %v156
    %v191 = vunpack.c.l.b16 %v157
    %v192 = vunpack.c.l.b16 %v158
    %v193 = vunpack.c.l.b16 %v159
    %v194 = vunpack.c.l.b16 %v160
    %v195 = vunpack.c.l.b16 %v161
    %v196 = vunpack.c.l.b16 %v162
    %v197 = vunpack.c.l.b16 %v163
    %v198 = vunpack.c.l.b16 %v164
    %v199 = vpack.c.b16 %v184, %v183
    %v200 = vpack.c.b16 %v186, %v185
    %v201 = vpack.c.b16 %v188, %v187
    %v202 = vpack.c.b16 %v190, %v189
    %v203 = vpack.c.b16 %v192, %v191
    %v204 = vpack.c.b16 %v194, %v193
    %v205 = vpack.c.b16 %v196, %v195
    %v206 = vpack.c.b16 %v198, %v197
    %215 = vmatpush.bf16.msra.mxu0 %v206
    %216 = vmatpush.bf16.msra.mxu0 %v205
    %217 = vmatpush.bf16.msra.mxu0 %v204
    %218 = vmatpush.bf16.msra.mxu0 %v203
    %219 = vmatpush.bf16.msra.mxu0 %v202
    %220 = vmatpush.bf16.msra.mxu0 %v201
    %221 = vmatpush.bf16.msra.mxu0 %v200
    %222 = vmatpush.bf16.msra.mxu0 %v199
    %223 = vmatmul.bf16.gmra.mxu0 %v148
    %v224 = vpop.f32.mrf.mxu0
    %v225 = vadd.f32 %v166, %v224
    %v226 = vpop.f32.mrf.mxu0
    %227 = vdwg.mxu0
    %v228 = vmax.f32 %v225, 0.0
    %v229 = vpack.c.bf16 %v228, %v228
    %v230 = vld [vmem:[#allocation8] sm:$0xff]
    %v231 = vld [vmem:[#allocation8 + $0x8] sm:$0xff]
    %v232 = vld [vmem:[#allocation8 + $0x10] sm:$0xff]
    %v233 = vld [vmem:[#allocation8 + $0x18] sm:$0xff]
    %v234 = vld [vmem:[#allocation8 + $0x20] sm:$0xff]
    %v235 = vld [vmem:[#allocation8 + $0x28] sm:$0xff]
    %v236 = vld [vmem:[#allocation8 + $0x30] sm:$0xff]
    %v237 = vld [vmem:[#allocation8 + $0x38] sm:$0xff]
    %v238 = vld [vmem:[#allocation8 + $0x40] sm:$0xff]
    %v239 = vld [vmem:[#allocation8 + $0x48] sm:$0xff]
    %v240 = vld [vmem:[#allocation8 + $0x50] sm:$0xff]
    %v241 = vld [vmem:[#allocation8 + $0x58] sm:$0xff]
    %v242 = vld [vmem:[#allocation8 + $0x60] sm:$0xff]
    %v243 = vld [vmem:[#allocation8 + $0x68] sm:$0xff]
    %v244 = vld [vmem:[#allocation8 + $0x70] sm:$0xff]
    %v245 = vld [vmem:[#allocation8 + $0x78] sm:$0xff]
    %s246 = scalar_lea.vmem [#allocation11], 2
    %v247 = vld [vmem:[%s246] ss:$4 sm:$0x3]
    %v249 = vperm.slane %v247, 0
    %v250 = vperm.slane %v247, 1
    %v269 = vunpack.c.l.b16 %v230
    %v270 = vunpack.c.h.b16 %v230
    %v271 = vunpack.c.l.b16 %v231
    %v272 = vunpack.c.h.b16 %v231
    %v273 = vunpack.c.l.b16 %v232
    %v274 = vunpack.c.h.b16 %v232
    %v275 = vunpack.c.l.b16 %v233
    %v276 = vunpack.c.h.b16 %v233
    %v277 = vunpack.c.l.b16 %v234
    %v278 = vunpack.c.h.b16 %v234
    %v279 = vunpack.c.l.b16 %v235
    %v280 = vunpack.c.h.b16 %v235
    %v281 = vunpack.c.l.b16 %v236
    %v282 = vunpack.c.h.b16 %v236
    %v283 = vunpack.c.l.b16 %v237
    %v284 = vunpack.c.h.b16 %v237
    %v285 = vunpack.c.l.b16 %v238
    %v286 = vunpack.c.h.b16 %v238
    %v287 = vunpack.c.l.b16 %v239
    %v288 = vunpack.c.h.b16 %v239
    %v289 = vunpack.c.l.b16 %v240
    %v290 = vunpack.c.h.b16 %v240
    %v291 = vunpack.c.l.b16 %v241
    %v292 = vunpack.c.h.b16 %v241
    %v293 = vunpack.c.l.b16 %v242
    %v294 = vunpack.c.h.b16 %v242
    %v295 = vunpack.c.l.b16 %v243
    %v296 = vunpack.c.h.b16 %v243
    %v297 = vunpack.c.l.b16 %v244
    %v298 = vunpack.c.h.b16 %v244
    %v299 = vunpack.c.l.b16 %v245
    %v300 = vunpack.c.h.b16 %v245
    %v301 = vpack.c.b16 %v271, %v269
    %v302 = vpack.c.b16 %v272, %v270
    %v303 = vpack.c.b16 %v275, %v273
    %v304 = vpack.c.b16 %v276, %v274
    %v305 = vpack.c.b16 %v279, %v277
    %v306 = vpack.c.b16 %v280, %v278
    %v307 = vpack.c.b16 %v283, %v281
    %v308 = vpack.c.b16 %v284, %v282
    %v309 = vpack.c.b16 %v287, %v285
    %v310 = vpack.c.b16 %v288, %v286
    %v311 = vpack.c.b16 %v291, %v289
    %v312 = vpack.c.b16 %v292, %v290
    %v313 = vpack.c.b16 %v295, %v293
    %v314 = vpack.c.b16 %v296, %v294
    %v315 = vpack.c.b16 %v299, %v297
    %v316 = vpack.c.b16 %v300, %v298
    %333 = vmatpush.bf16.msra.mxu0 %v315
    %334 = vmatpush.bf16.msra.mxu0 %v313
    %335 = vmatpush.bf16.msra.mxu0 %v311
    %336 = vmatpush.bf16.msra.mxu0 %v309
    %337 = vmatpush.bf16.msra.mxu0 %v307
    %338 = vmatpush.bf16.msra.mxu0 %v305
    %339 = vmatpush.bf16.msra.mxu0 %v303
    %340 = vmatpush.bf16.msra.mxu0 %v301
    %341 = vmatmul.bf16.gmra.mxu0 %v229
    %v342 = vpop.f32.mrf.mxu0
    %v343 = vadd.f32 %v249, %v342
    %v344 = vpop.f32.mrf.mxu0
    %345 = vdwg.mxu0
    %346 = vmatpush.bf16.msra.mxu0 %v316
    %347 = vmatpush.bf16.msra.mxu0 %v314
    %348 = vmatpush.bf16.msra.mxu0 %v312
    %349 = vmatpush.bf16.msra.mxu0 %v310
    %350 = vmatpush.bf16.msra.mxu0 %v308
    %351 = vmatpush.bf16.msra.mxu0 %v306
    %352 = vmatpush.bf16.msra.mxu0 %v304
    %353 = vmatpush.bf16.msra.mxu0 %v302
    %354 = vmatmul.bf16.gmra.mxu0 %v229
    %v355 = vpop.f32.mrf.mxu0
    %v356 = vadd.f32 %v250, %v355
    %v357 = vpop.f32.mrf.mxu0
    %358 = vdwg.mxu0
    %v359 = vmax.f32 %v343, 0.0
    %v360 = vmax.f32 %v356, 0.0
    %v361 = vpack.c.bf16 %v359, %v359
    %v362 = vpack.c.bf16 %v360, %v360
    %v363 = vld [vmem:[#allocation10] sm:$0xff]
    %v364 = vld [vmem:[#allocation10 + $0x8] sm:$0xff]
    %v365 = vld [vmem:[#allocation10 + $0x10] sm:$0xff]
    %v366 = vld [vmem:[#allocation10 + $0x18] sm:$0xff]
    %v367 = vld [vmem:[#allocation10 + $0x20] sm:$0xff]
    %v368 = vld [vmem:[#allocation10 + $0x28] sm:$0xff]
    %v369 = vld [vmem:[#allocation10 + $0x30] sm:$0xff]
    %v370 = vld [vmem:[#allocation10 + $0x38] sm:$0xff]
    %v371 = vld [vmem:[#allocation10 + $0x40] sm:$0xff]
    %v372 = vld [vmem:[#allocation10 + $0x48] sm:$0xff]
    %v373 = vld [vmem:[#allocation10 + $0x50] sm:$0xff]
    %v374 = vld [vmem:[#allocation10 + $0x58] sm:$0xff]
    %v375 = vld [vmem:[#allocation10 + $0x60] sm:$0xff]
    %v376 = vld [vmem:[#allocation10 + $0x68] sm:$0xff]
    %v377 = vld [vmem:[#allocation10 + $0x70] sm:$0xff]
    %v378 = vld [vmem:[#allocation10 + $0x78] sm:$0xff]
    %v379 = vld [vmem:[#allocation10 + $0x80] sm:$0xff]
    %v380 = vld [vmem:[#allocation10 + $0x88] sm:$0xff]
    %v381 = vld [vmem:[#allocation10 + $0x90] sm:$0xff]
    %v382 = vld [vmem:[#allocation10 + $0x98] sm:$0xff]
    %v383 = vld [vmem:[#allocation10 + $0xa0] sm:$0xff]
    %v384 = vld [vmem:[#allocation10 + $0xa8] sm:$0xff]
    %v385 = vld [vmem:[#allocation10 + $0xb0] sm:$0xff]
    %v386 = vld [vmem:[#allocation10 + $0xb8] sm:$0xff]
    %v387 = vld [vmem:[#allocation10 + $0xc0] sm:$0xff]
    %v388 = vld [vmem:[#allocation10 + $0xc8] sm:$0xff]
    %v389 = vld [vmem:[#allocation10 + $0xd0] sm:$0xff]
    %v390 = vld [vmem:[#allocation10 + $0xd8] sm:$0xff]
    %v391 = vld [vmem:[#allocation10 + $0xe0] sm:$0xff]
    %v392 = vld [vmem:[#allocation10 + $0xe8] sm:$0xff]
    %v393 = vld [vmem:[#allocation10 + $0xf0] sm:$0xff]
    %v394 = vld [vmem:[#allocation10 + $0xf8] sm:$0xff]
    %s395 = scalar_lea.vmem [#allocation11], 3
    %v396 = vld [vmem:[%s395] ss:$4 sm:$0x3]
    %v398 = vperm.slane %v396, 0
    %v399 = vperm.slane %v396, 1
    %v434 = vunpack.c.l.b16 %v363
    %v435 = vunpack.c.h.b16 %v363
    %v436 = vunpack.c.l.b16 %v364
    %v437 = vunpack.c.h.b16 %v364
    %v438 = vunpack.c.l.b16 %v365
    %v439 = vunpack.c.h.b16 %v365
    %v440 = vunpack.c.l.b16 %v366
    %v441 = vunpack.c.h.b16 %v366
    %v442 = vunpack.c.l.b16 %v367
    %v443 = vunpack.c.h.b16 %v367
    %v444 = vunpack.c.l.b16 %v368
    %v445 = vunpack.c.h.b16 %v368
    %v446 = vunpack.c.l.b16 %v369
    %v447 = vunpack.c.h.b16 %v369
    %v448 = vunpack.c.l.b16 %v370
    %v449 = vunpack.c.h.b16 %v370
    %v450 = vunpack.c.l.b16 %v371
    %v451 = vunpack.c.h.b16 %v371
    %v452 = vunpack.c.l.b16 %v372
    %v453 = vunpack.c.h.b16 %v372
    %v454 = vunpack.c.l.b16 %v373
    %v455 = vunpack.c.h.b16 %v373
    %v456 = vunpack.c.l.b16 %v374
    %v457 = vunpack.c.h.b16 %v374
    %v458 = vunpack.c.l.b16 %v375
    %v459 = vunpack.c.h.b16 %v375
    %v460 = vunpack.c.l.b16 %v376
    %v461 = vunpack.c.h.b16 %v376
    %v462 = vunpack.c.l.b16 %v377
    %v463 = vunpack.c.h.b16 %v377
    %v464 = vunpack.c.l.b16 %v378
    %v465 = vunpack.c.h.b16 %v378
    %v466 = vunpack.c.l.b16 %v379
    %v467 = vunpack.c.h.b16 %v379
    %v468 = vunpack.c.l.b16 %v380
    %v469 = vunpack.c.h.b16 %v380
    %v470 = vunpack.c.l.b16 %v381
    %v471 = vunpack.c.h.b16 %v381
    %v472 = vunpack.c.l.b16 %v382
    %v473 = vunpack.c.h.b16 %v382
    %v474 = vunpack.c.l.b16 %v383
    %v475 = vunpack.c.h.b16 %v383
    %v476 = vunpack.c.l.b16 %v384
    %v477 = vunpack.c.h.b16 %v384
    %v478 = vunpack.c.l.b16 %v385
    %v479 = vunpack.c.h.b16 %v385
    %v480 = vunpack.c.l.b16 %v386
    %v481 = vunpack.c.h.b16 %v386
    %v482 = vunpack.c.l.b16 %v387
    %v483 = vunpack.c.h.b16 %v387
    %v484 = vunpack.c.l.b16 %v388
    %v485 = vunpack.c.h.b16 %v388
    %v486 = vunpack.c.l.b16 %v389
    %v487 = vunpack.c.h.b16 %v389
    %v488 = vunpack.c.l.b16 %v390
    %v489 = vunpack.c.h.b16 %v390
    %v490 = vunpack.c.l.b16 %v391
    %v491 = vunpack.c.h.b16 %v391
    %v492 = vunpack.c.l.b16 %v392
    %v493 = vunpack.c.h.b16 %v392
    %v494 = vunpack.c.l.b16 %v393
    %v495 = vunpack.c.h.b16 %v393
    %v496 = vunpack.c.l.b16 %v394
    %v497 = vunpack.c.h.b16 %v394
    %v498 = vpack.c.b16 %v436, %v434
    %v499 = vpack.c.b16 %v437, %v435
    %v500 = vpack.c.b16 %v440, %v438
    %v501 = vpack.c.b16 %v441, %v439
    %v502 = vpack.c.b16 %v444, %v442
    %v503 = vpack.c.b16 %v445, %v443
    %v504 = vpack.c.b16 %v448, %v446
    %v505 = vpack.c.b16 %v449, %v447
    %v506 = vpack.c.b16 %v452, %v450
    %v507 = vpack.c.b16 %v453, %v451
    %v508 = vpack.c.b16 %v456, %v454
    %v509 = vpack.c.b16 %v457, %v455
    %v510 = vpack.c.b16 %v460, %v458
    %v511 = vpack.c.b16 %v461, %v459
    %v512 = vpack.c.b16 %v464, %v462
    %v513 = vpack.c.b16 %v465, %v463
    %v514 = vpack.c.b16 %v468, %v466
    %v515 = vpack.c.b16 %v469, %v467
    %v516 = vpack.c.b16 %v472, %v470
    %v517 = vpack.c.b16 %v473, %v471
    %v518 = vpack.c.b16 %v476, %v474
    %v519 = vpack.c.b16 %v477, %v475
    %v520 = vpack.c.b16 %v480, %v478
    %v521 = vpack.c.b16 %v481, %v479
    %v522 = vpack.c.b16 %v484, %v482
    %v523 = vpack.c.b16 %v485, %v483
    %v524 = vpack.c.b16 %v488, %v486
    %v525 = vpack.c.b16 %v489, %v487
    %v526 = vpack.c.b16 %v492, %v490
    %v527 = vpack.c.b16 %v493, %v491
    %v528 = vpack.c.b16 %v496, %v494
    %v529 = vpack.c.b16 %v497, %v495
    %562 = vmatpush.bf16.msra.mxu0 %v512
    %563 = vmatpush.bf16.msra.mxu0 %v510
    %564 = vmatpush.bf16.msra.mxu0 %v508
    %565 = vmatpush.bf16.msra.mxu0 %v506
    %566 = vmatpush.bf16.msra.mxu0 %v504
    %567 = vmatpush.bf16.msra.mxu0 %v502
    %568 = vmatpush.bf16.msra.mxu0 %v500
    %569 = vmatpush.bf16.msra.mxu0 %v498
    %570 = vmatmul.bf16.gmra.mxu0 %v361
    %v571 = vpop.f32.mrf.mxu0
    %v572 = vadd.f32 %v398, %v571
    %v573 = vpop.f32.mrf.mxu0
    %574 = vdwg.mxu0
    %575 = vmatpush.bf16.msra.mxu0 %v528
    %576 = vmatpush.bf16.msra.mxu0 %v526
    %577 = vmatpush.bf16.msra.mxu0 %v524
    %578 = vmatpush.bf16.msra.mxu0 %v522
    %579 = vmatpush.bf16.msra.mxu0 %v520
    %580 = vmatpush.bf16.msra.mxu0 %v518
    %581 = vmatpush.bf16.msra.mxu0 %v516
    %582 = vmatpush.bf16.msra.mxu0 %v514
    %583 = vmatmul.bf16.gmra.mxu0 %v362
    %v584 = vpop.f32.mrf.mxu0
    %v585 = vadd.f32 %v572, %v584
    %v586 = vpop.f32.mrf.mxu0
    %587 = vdwg.mxu0
    %588 = vmatpush.bf16.msra.mxu0 %v513
    %589 = vmatpush.bf16.msra.mxu0 %v511
    %590 = vmatpush.bf16.msra.mxu0 %v509
    %591 = vmatpush.bf16.msra.mxu0 %v507
    %592 = vmatpush.bf16.msra.mxu0 %v505
    %593 = vmatpush.bf16.msra.mxu0 %v503
    %594 = vmatpush.bf16.msra.mxu0 %v501
    %595 = vmatpush.bf16.msra.mxu0 %v499
    %596 = vmatmul.bf16.gmra.mxu0 %v361
    %v597 = vpop.f32.mrf.mxu0
    %v598 = vadd.f32 %v399, %v597
    %v599 = vpop.f32.mrf.mxu0
    %600 = vdwg.mxu0
    %601 = vmatpush.bf16.msra.mxu0 %v529
    %602 = vmatpush.bf16.msra.mxu0 %v527
    %603 = vmatpush.bf16.msra.mxu0 %v525
    %604 = vmatpush.bf16.msra.mxu0 %v523
    %605 = vmatpush.bf16.msra.mxu0 %v521
    %606 = vmatpush.bf16.msra.mxu0 %v519
    %607 = vmatpush.bf16.msra.mxu0 %v517
    %608 = vmatpush.bf16.msra.mxu0 %v515
    %609 = vmatmul.bf16.gmra.mxu0 %v362
    %v610 = vpop.f32.mrf.mxu0
    %v611 = vadd.f32 %v598, %v610
    %v612 = vpop.f32.mrf.mxu0
    %613 = vdwg.mxu0
    %v614 = vmax.f32 %v585, %v611
    %615 = vmax.xlane.f32.xlu0 %v614
    %v616 = vpop.xlane.xlu0 %615
    %v617 = vsub.f32 %v585, %v616
    %v618 = vsub.f32 %v611, %v616
    %v619 = vmul.f32 %v617, 1.442695
    %v620 = vpow.pop %v619
    %v621 = vmul.f32 %v618, 1.442695
    %v622 = vpow.pop %v621
    %v623 = vadd.f32 %v620, %v622
    %624 = vadd.xlane.f32.xlu0 %v623
    %v625 = vpop.xlane.xlu0 %624
    %v626 = vrcp.pop %v625
    %v627 = vmul.f32 %v625, %v626
    %v628 = vsub.f32 1.0, %v627
    %v629 = vmul.f32 %v626, %v628
    %v630 = vadd.f32 %v626, %v629
    %vm631 = vweird.f32 %v625
    %vm632 = vweird.f32 %v626
    %vm633 = vmor %vm631, %vm632
    %v634 = vsel %vm633, %v626, %v630
    %v635 = vand.u32 2147483647, %v625
    %vm636 = vcmp.eq.f32.partialorder %v635, 8.507059e+37
    %v637 = vand.u32 %v625, 2147483648
    %v638 = vor.u32 1.1754944e-38, %v637
    %v639 = vsel %vm636, %v638, %v634
    %v640 = vmul.f32 %v620, %v639
    %v641 = vmul.f32 %v622, %v639
    %642 = vst [vmem:[#allocation13] sm:$0xff] %v640
    %643 = vst [vmem:[#allocation13 + $0x8] sm:$0xff] %v641
    // Predicated region
    $region50: #{tpu_custom_call.1} parent=1 // pred_check
      _
    $region51: #{tpu_custom_call.1} parent=1 // pred_check_branch
      %645 = sbr.rel (0) target = $region53
    $region52: #{tpu_custom_call.1} parent=1 // pred_region
      %647 = vsyncadd [#allocation4], 0
      %s649 = sshll.u32 [#allocation13], 4
      %s650 = int_to_ptr.vmem [resolvable:$true] %s649
      %s651 = sshll.u32 %s6, 4
      %s652 = int_to_ptr.hbm [resolvable:$true] %s651
      %654 = dma.vmem_to_hbm [thread:$0]  %s650, 256, %s652, [#allocation4]
    $region53: #{tpu_custom_call.1} parent=1 // pred_fallthru
      _
    // Predicated region
    $region54: #{tpu_custom_call.1} parent=1 // pred_check
      _
    $region55: #{tpu_custom_call.1} parent=1 // pred_check_branch
      %656 = sbr.rel (0) target = $region57
    $region56: #{tpu_custom_call.1} parent=1 // pred_region
      %658 = dma.done [#allocation4], 256
    $region57: #{tpu_custom_call.1} parent=1 // pred_fallthru
      _
    %659 = vsyncpa [#allocation3], 1
    %660 = vsyncpa [#allocation6], 1
    %661 = vsyncpa [#allocation9], 1
    %662 = vsyncpa [#allocation12], 1
    %663 = vsyncpa [#allocation4], 1

</llo_original>
